<compile_context>
chip_gen: v5e
topology: v5e:2x2
jax: 0.10.0
libtpu: 0.0.40
codegen_flags: <defaults>
</compile_context>

<pallas_src>
import functools

import jax
import jax.numpy as jnp
from jax.experimental import pallas as pl
from jax.experimental.pallas import tpu as pltpu


def _round_up(x, m):
    return (x + m - 1) // m * m


def _vmem_budget_bytes():
    """Generation-aware VMEM budget for the input pipeline + accumulators."""
    try:
        cap = int(pltpu.get_tpu_info().vmem_capacity_bytes)
        return min(max(cap // 3, 16 * 1024 * 1024), 40 * 1024 * 1024)
    except Exception:
        return 32 * 1024 * 1024


_VMEM_BUDGET = _vmem_budget_bytes()


def _pick_rows_per_sample(n, s, min_itemsize):
    """Split each sample's spatial axis over r rows so blocks fill sublanes."""
    target_rows = max(8, 32 // max(1, min_itemsize))   # 8 f32, 16 bf16, 32 int8
    r = 1
    while n * r < target_rows and s % (2 * r) == 0 and n * r * 2 <= 64:
        r *= 2
    return r


def _build_kernel(rows, tile, acc_w, steps, rem):
    """Build the streaming-reduction kernel body (all sizes are static)."""
    n_slices = tile // acc_w
    last_full = rem // acc_w
    last_part = rem % acc_w

    full_plan = [(j, None) for j in range(n_slices)]
    last_plan = [(j, None) for j in range(last_full)]
    if last_part:
        last_plan.append((last_full, last_part))          # static partial mask

    def _accumulate(x_ref, y_ref, out_refs, plan):
        # Carried lane-dense accumulators; written back to the refs once.
        accs = [jnp.zeros((rows, acc_w), jnp.float32) for _ in range(4)]
        for j, valid_lanes in plan:
            xs = x_ref[:, j * acc_w:(j + 1) * acc_w].astype(jnp.float32)
            ys = y_ref[:, j * acc_w:(j + 1) * acc_w].astype(jnp.float32)
            # sigmoid(x) > 0.5  <=>  x > 0 (sigmoid is monotone).
            pos = xs > 0.0
            # BCEWithLogitsLoss elementwise term (numerically stable form):
            #   max(x, 0) - x*y + log1p(exp(-|x|))
            bce = jnp.maximum(xs, 0.0) - xs * ys + jnp.log1p(jnp.exp(-jnp.abs(xs)))
            if valid_lanes is not None:
                # Boundary slice of the last grid step: static lane mask kills
                # any garbage read past the valid extent (DMA is clamped).
                col = jax.lax.broadcasted_iota(jnp.int32, (rows, acc_w), 1)
                mask = col < valid_lanes
                pos = jnp.logical_and(pos, mask)
                ys = jnp.where(mask, ys, 0.0)
                bce = jnp.where(mask, bce, 0.0)
            inter = jnp.where(pos, ys, 0.0)
            pcnt = pos.astype(jnp.float32)
            accs = [accs[0] + inter, accs[1] + pcnt, accs[2] + ys, accs[3] + bce]
        for ref, acc in zip(out_refs, accs):
            ref[...] += acc

    def kernel(x_ref, y_ref, inter_ref, pcnt_ref, tsum_ref, bce_ref):
        out_refs = (inter_ref, pcnt_ref, tsum_ref, bce_ref)

        @pl.when(pl.program_id(0) == 0)
        def _init():
            for ref in out_refs:
                ref[...] = jnp.zeros_like(ref)

        if rem == tile:
            # Every grid step is fully valid: single mask-free path.
            _accumulate(x_ref, y_ref, out_refs, full_plan)
        else:
            k = pl.program_id(0)

            @pl.when(k < steps - 1)
            def _bulk():
                _accumulate(x_ref, y_ref, out_refs, full_plan)

            @pl.when(k == steps - 1)
            def _tail():
                _accumulate(x_ref, y_ref, out_refs, last_plan)

    return kernel


@functools.partial(jax.jit, static_argnames=("lane_tile",))
def dice_loss_w_sigmoid(inputs, targets, lane_tile=None):
    """Forward of DiceLossWSigmoid: 0.7 * dice_loss + 0.3 * bce_loss.

    inputs, targets: (N, 1, D, H, W); inputs are logits, targets are 0/1 masks.
    `lane_tile` (static) optionally forces a small lane tile (used by tests).
    """
    smooth = 1e-05
    n = inputs.shape[0]
    s = 1
    for d in inputs.shape[1:]:
        s *= d

    ix = jnp.dtype(inputs.dtype).itemsize
    iy = jnp.dtype(targets.dtype).itemsize

    r_rows = _pick_rows_per_sample(n, s, min(ix, iy))
    rows = n * r_rows
    seg_len = s // r_rows                        # per-row length (free reshape)
    rows_pad8 = _round_up(rows, 8)

    if seg_len < 128:
        # Tiny input: one full-extent block, accumulator matches its width.
        acc_w = seg_len
        tile = seg_len
    else:
        acc_w = 256 if rows_pad8 <= 16 else 128
        nsl_cap = 64                              # bounds in-kernel unrolling
        t_target = (2 * 1024 * 1024) // max(1, rows * (ix + iy))
        t_budget = (3 * _VMEM_BUDGET // 4) // (2 * 2 * rows_pad8 * 4)
        t_data = (seg_len // 128) * 128           # never exceed the array width
        t_cand = max(128, min(t_target, t_budget, nsl_cap * acc_w, t_data))
        if lane_tile is not None:
            t_cand = max(128, min((int(lane_tile) // 128) * 128, t_data))
        if t_cand < acc_w:
            acc_w = 128
        tile = (t_cand // acc_w) * acc_w

    steps = -(-seg_len // tile)                   # ceil
    rem = seg_len - (steps - 1) * tile            # valid lanes in the last step

    # Free (row-major) view reshapes -- no padding, no extra HBM pass.
    x = inputs.reshape(rows, seg_len)
    y = targets.reshape(rows, seg_len)

    kernel = _build_kernel(rows, tile, acc_w, steps, rem)

    in_spec = pl.BlockSpec((rows, tile), lambda k: (0, k))
    acc_spec = pl.BlockSpec((rows, acc_w), lambda k: (0, 0))
    acc_shape = jax.ShapeDtypeStruct((rows, acc_w), jnp.float32)

    # 2 inputs x 2 pipeline buffers (f32-equivalent sublane padding) + accs.
    vmem_needed = (2 * 2 * rows_pad8 * tile * 4
                   + 4 * 2 * rows_pad8 * max(acc_w, 128) * 4)
    vmem_limit = min(max(vmem_needed + 2 * 1024 * 1024, 16 * 1024 * 1024),
                     max(_VMEM_BUDGET, 32 * 1024 * 1024))

    inter, pcnt, tsum, bce = pl.pallas_call(
        kernel,
        out_shape=(acc_shape, acc_shape, acc_shape, acc_shape),
        grid_spec=pltpu.PrefetchScalarGridSpec(
            num_scalar_prefetch=0,
            grid=(steps,),
            in_specs=[in_spec, in_spec],
            out_specs=[acc_spec] * 4,
        ),
        compiler_params=pltpu.CompilerParams(
            dimension_semantics=("arbitrary",),
            vmem_limit_bytes=int(vmem_limit),
        ),
    )(x, y)

    # Tiny scalar epilogue in plain JAX: fold lanes + per-sample rows.
    inter_s = inter.reshape(n, -1).sum(axis=1)
    pcnt_s = pcnt.reshape(n, -1).sum(axis=1)
    tsum_s = tsum.reshape(n, -1).sum(axis=1)
    bce_sum = bce.sum()

    dice_score = (2.0 * inter_s + smooth) / (pcnt_s + tsum_s + smooth)   # (N,)
    dice_loss = 1.0 - jnp.mean(dice_score)
    bce_loss = bce_sum / (n * s)
    # TODO(synk): on v7x, shard the reduction grid across both TensorCores
    # (pltpu.CORE_PARALLEL / pl.core_map) to use both TCs' HBM bandwidth.
    return 0.7 * dice_loss + 0.3 * bce_loss


def _reference(inputs, targets):
    """Pure-JAX reference mirroring the PyTorch module, for a sanity check."""
    smooth = 1e-05
    x = inputs.astype(jnp.float32)
    y = targets.astype(jnp.float32)
    pred = (jax.nn.sigmoid(x) > 0.5).astype(jnp.float32)
    inter = jnp.sum(pred * y, axis=(2, 3, 4))
    dice_score = (2 * inter + smooth) / (
        jnp.sum(pred, axis=(2, 3, 4)) + jnp.sum(y, axis=(2, 3, 4)) + smooth
    )
    dice_loss = 1.0 - jnp.mean(dice_score)
    bce = jnp.maximum(x, 0.0) - x * y + jnp.log1p(jnp.exp(-jnp.abs(x)))
    bce_loss = jnp.mean(bce)
    return 0.7 * dice_loss + 0.3 * bce_loss


if __name__ == "__main__":
    key = jax.random.PRNGKey(0)

    def make_case(k, shape):
        k1, k2 = jax.random.split(k)
        x = jax.random.normal(k1, shape, dtype=jnp.float32) * 2.0
        y = (jax.random.uniform(k2, shape) > 0.5).astype(jnp.float32)
        return x, y

    k1, k2, k3 = jax.random.split(key, 3)

    # Case 1: small aligned shape (N, 1, D, H, W); S = 4*8*16 = 512.
    x1, y1 = make_case(k1, (2, 1, 4, 8, 16))
    loss1 = jax.block_until_ready(dice_loss_w_sigmoid(x1, y1))
    ref1 = _reference(x1, y1)
    assert jnp.allclose(loss1, ref1, atol=1e-5, rtol=1e-4), (loss1, ref1)

    # Case 2: ragged lane axis + multiple grid steps (forced small lane tile).
    x2, y2 = make_case(k2, (2, 1, 8, 9, 16))     # S = 1152 -> 3 steps, tail = 32
    loss2 = jax.block_until_ready(dice_loss_w_sigmoid(x2, y2, lane_tile=128))
    ref2 = _reference(x2, y2)
    assert jnp.allclose(loss2, ref2, atol=1e-5, rtol=1e-4), (loss2, ref2)

    # Case 3: tiny odd spatial size (single narrow full-extent block).
    x3, y3 = make_case(k3, (1, 1, 3, 7, 5))      # S = 105 < 128
    loss3 = jax.block_until_ready(dice_loss_w_sigmoid(x3, y3))
    ref3 = _reference(x3, y3)
    assert jnp.allclose(loss3, ref3, atol=1e-5, rtol=1e-4), (loss3, ref3)

    print("KERNEL_OK")
</pallas_src>

<mosaic_0001>
module attributes {stable_mosaic.version = 11 : i64} {
  func.func @kernel(%arg0: i32, %arg1: memref<8x128xf32, #tpu.memory_space<vmem>>, %arg2: memref<8x128xf32, #tpu.memory_space<vmem>>, %arg3: memref<8x128xf32, #tpu.memory_space<vmem>>, %arg4: memref<8x128xf32, #tpu.memory_space<vmem>>, %arg5: memref<8x128xf32, #tpu.memory_space<vmem>>, %arg6: memref<8x128xf32, #tpu.memory_space<vmem>>) attributes {dimension_semantics = [#tpu.dimension_semantics<arbitrary>], iteration_bounds = array<i64: 1>, scalar_prefetch = 0 : i64, scratch_operands = 0 : i64, tpu.core_type = #tpu.core_type<tc>, window_params = [{transform_indices = @transform_0, window_bounds = array<i64: 8, 128>}, {transform_indices = @transform_1, window_bounds = array<i64: 8, 128>}, {pipeline_mode = #tpu.pipeline_mode<synchronous>, transform_indices = @transform_2, window_bounds = array<i64: 8, 128>}, {pipeline_mode = #tpu.pipeline_mode<synchronous>, transform_indices = @transform_3, window_bounds = array<i64: 8, 128>}, {pipeline_mode = #tpu.pipeline_mode<synchronous>, transform_indices = @transform_4, window_bounds = array<i64: 8, 128>}, {pipeline_mode = #tpu.pipeline_mode<synchronous>, transform_indices = @transform_5, window_bounds = array<i64: 8, 128>}]} {
    %c0_i32 = arith.constant 0 : i32
    %0 = arith.cmpi eq, %arg0, %c0_i32 : i32
    %1 = arith.extui %0 : i1 to i32
    %c0_i32_0 = arith.constant 0 : i32
    %2 = arith.cmpi ne, %1, %c0_i32_0 : i32
    scf.if %2 {
      %cst_27 = arith.constant 0.000000e+00 : f32
      %41 = vector.broadcast %cst_27 : f32 to vector<8x128xf32>
      %c0_28 = arith.constant 0 : index
      %c0_29 = arith.constant 0 : index
      %42 = vector.load %arg3[%c0_28, %c0_29] : memref<8x128xf32, #tpu.memory_space<vmem>>, vector<8x128xf32>
      tpu.vector_store %arg3[%c0_28, %c0_29], %41 {strides = array<i32>} : memref<8x128xf32, #tpu.memory_space<vmem>>, vector<8x128xf32>,
      %cst_30 = arith.constant 0.000000e+00 : f32
      %43 = vector.broadcast %cst_30 : f32 to vector<8x128xf32>
      %c0_31 = arith.constant 0 : index
      %c0_32 = arith.constant 0 : index
      %44 = vector.load %arg4[%c0_31, %c0_32] : memref<8x128xf32, #tpu.memory_space<vmem>>, vector<8x128xf32>
      tpu.vector_store %arg4[%c0_31, %c0_32], %43 {strides = array<i32>} : memref<8x128xf32, #tpu.memory_space<vmem>>, vector<8x128xf32>,
      %cst_33 = arith.constant 0.000000e+00 : f32
      %45 = vector.broadcast %cst_33 : f32 to vector<8x128xf32>
      %c0_34 = arith.constant 0 : index
      %c0_35 = arith.constant 0 : index
      %46 = vector.load %arg5[%c0_34, %c0_35] : memref<8x128xf32, #tpu.memory_space<vmem>>, vector<8x128xf32>
      tpu.vector_store %arg5[%c0_34, %c0_35], %45 {strides = array<i32>} : memref<8x128xf32, #tpu.memory_space<vmem>>, vector<8x128xf32>,
      %cst_36 = arith.constant 0.000000e+00 : f32
      %47 = vector.broadcast %cst_36 : f32 to vector<8x128xf32>
      %c0_37 = arith.constant 0 : index
      %c0_38 = arith.constant 0 : index
      %48 = vector.load %arg6[%c0_37, %c0_38] : memref<8x128xf32, #tpu.memory_space<vmem>>, vector<8x128xf32>
      tpu.vector_store %arg6[%c0_37, %c0_38], %47 {strides = array<i32>} : memref<8x128xf32, #tpu.memory_space<vmem>>, vector<8x128xf32>,
    } else {
    }
    %cst = arith.constant 0.000000e+00 : f32
    %3 = vector.broadcast %cst : f32 to vector<8x128xf32>
    %cst_1 = arith.constant 0.000000e+00 : f32
    %4 = vector.broadcast %cst_1 : f32 to vector<8x128xf32>
    %cst_2 = arith.constant 0.000000e+00 : f32
    %5 = vector.broadcast %cst_2 : f32 to vector<8x128xf32>
    %cst_3 = arith.constant 0.000000e+00 : f32
    %6 = vector.broadcast %cst_3 : f32 to vector<8x128xf32>
    %c0 = arith.constant 0 : index
    %c0_4 = arith.constant 0 : index
    %7 = vector.load %arg1[%c0, %c0_4] : memref<8x128xf32, #tpu.memory_space<vmem>>, vector<8x128xf32>
    %c0_5 = arith.constant 0 : index
    %c0_6 = arith.constant 0 : index
    %8 = vector.load %arg2[%c0_5, %c0_6] : memref<8x128xf32, #tpu.memory_space<vmem>>, vector<8x128xf32>
    %cst_7 = arith.constant 0.000000e+00 : f32
    %9 = vector.broadcast %cst_7 : f32 to vector<8x128xf32>
    %10 = arith.cmpf ogt, %7, %9 : vector<8x128xf32>
    %cst_8 = arith.constant 0.000000e+00 : f32
    %11 = vector.broadcast %cst_8 : f32 to vector<8x128xf32>
    %12 = arith.maximumf %7, %11 : vector<8x128xf32>
    %13 = arith.mulf %7, %8 : vector<8x128xf32>
    %14 = arith.subf %12, %13 : vector<8x128xf32>
    %15 = math.absf %7 : vector<8x128xf32>
    %cst_9 = arith.constant 0.000000e+00 : f32
    %16 = vector.broadcast %cst_9 : f32 to vector<8x128xf32>
    %17 = arith.subf %16, %15 : vector<8x128xf32>
    %18 = math.exp %17 : vector<8x128xf32>
    %19 = math.log1p %18 : vector<8x128xf32>
    %20 = arith.addf %14, %19 : vector<8x128xf32>
    %cst_10 = arith.constant 0.000000e+00 : f32
    %21 = vector.broadcast %cst_10 : f32 to vector<8x128xf32>
    %22 = arith.select %10, %8, %21 : vector<8x128xi1>, vector<8x128xf32>
    %23 = arith.extui %10 : vector<8x128xi1> to vector<8x128xi32>
    %24 = arith.sitofp %23 : vector<8x128xi32> to vector<8x128xf32>
    %25 = arith.addf %3, %22 : vector<8x128xf32>
    %26 = arith.addf %4, %24 : vector<8x128xf32>
    %27 = arith.addf %5, %8 : vector<8x128xf32>
    %28 = arith.addf %6, %20 : vector<8x128xf32>
    %c0_11 = arith.constant 0 : index
    %c0_12 = arith.constant 0 : index
    %29 = vector.load %arg3[%c0_11, %c0_12] : memref<8x128xf32, #tpu.memory_space<vmem>>, vector<8x128xf32>
    %30 = arith.addf %29, %25 : vector<8x128xf32>
    %c0_13 = arith.constant 0 : index
    %c0_14 = arith.constant 0 : index
    %31 = vector.load %arg3[%c0_13, %c0_14] : memref<8x128xf32, #tpu.memory_space<vmem>>, vector<8x128xf32>
    tpu.vector_store %arg3[%c0_13, %c0_14], %30 {strides = array<i32>} : memref<8x128xf32, #tpu.memory_space<vmem>>, vector<8x128xf32>,
    %c0_15 = arith.constant 0 : index
    %c0_16 = arith.constant 0 : index
    %32 = vector.load %arg4[%c0_15, %c0_16] : memref<8x128xf32, #tpu.memory_space<vmem>>, vector<8x128xf32>
    %33 = arith.addf %32, %26 : vector<8x128xf32>
    %c0_17 = arith.constant 0 : index
    %c0_18 = arith.constant 0 : index
    %34 = vector.load %arg4[%c0_17, %c0_18] : memref<8x128xf32, #tpu.memory_space<vmem>>, vector<8x128xf32>
    tpu.vector_store %arg4[%c0_17, %c0_18], %33 {strides = array<i32>} : memref<8x128xf32, #tpu.memory_space<vmem>>, vector<8x128xf32>,
    %c0_19 = arith.constant 0 : index
    %c0_20 = arith.constant 0 : index
    %35 = vector.load %arg5[%c0_19, %c0_20] : memref<8x128xf32, #tpu.memory_space<vmem>>, vector<8x128xf32>
    %36 = arith.addf %35, %27 : vector<8x128xf32>
    %c0_21 = arith.constant 0 : index
    %c0_22 = arith.constant 0 : index
    %37 = vector.load %arg5[%c0_21, %c0_22] : memref<8x128xf32, #tpu.memory_space<vmem>>, vector<8x128xf32>
    tpu.vector_store %arg5[%c0_21, %c0_22], %36 {strides = array<i32>} : memref<8x128xf32, #tpu.memory_space<vmem>>, vector<8x128xf32>,
    %c0_23 = arith.constant 0 : index
    %c0_24 = arith.constant 0 : index
    %38 = vector.load %arg6[%c0_23, %c0_24] : memref<8x128xf32, #tpu.memory_space<vmem>>, vector<8x128xf32>
    %39 = arith.addf %38, %28 : vector<8x128xf32>
    %c0_25 = arith.constant 0 : index
    %c0_26 = arith.constant 0 : index
    %40 = vector.load %arg6[%c0_25, %c0_26] : memref<8x128xf32, #tpu.memory_space<vmem>>, vector<8x128xf32>
    tpu.vector_store %arg6[%c0_25, %c0_26], %39 {strides = array<i32>} : memref<8x128xf32, #tpu.memory_space<vmem>>, vector<8x128xf32>,
    return
  }
  func.func @transform_0(%arg0: i32) -> (i32, i32) {
    %c0_i32 = arith.constant 0 : i32
    %c0_i32_0 = arith.constant 0 : i32
    return %c0_i32, %arg0 : i32, i32
  }
  func.func @transform_1(%arg0: i32) -> (i32, i32) {
    %c0_i32 = arith.constant 0 : i32
    %c0_i32_0 = arith.constant 0 : i32
    return %c0_i32, %arg0 : i32, i32
  }
  func.func @transform_2(%arg0: i32) -> (i32, i32) {
    %c0_i32 = arith.constant 0 : i32
    %c0_i32_0 = arith.constant 0 : i32
    %c0_i32_1 = arith.constant 0 : i32
    return %c0_i32, %c0_i32_0 : i32, i32
  }
  func.func @transform_3(%arg0: i32) -> (i32, i32) {
    %c0_i32 = arith.constant 0 : i32
    %c0_i32_0 = arith.constant 0 : i32
    %c0_i32_1 = arith.constant 0 : i32
    return %c0_i32, %c0_i32_0 : i32, i32
  }
  func.func @transform_4(%arg0: i32) -> (i32, i32) {
    %c0_i32 = arith.constant 0 : i32
    %c0_i32_0 = arith.constant 0 : i32
    %c0_i32_1 = arith.constant 0 : i32
    return %c0_i32, %c0_i32_0 : i32, i32
  }
  func.func @transform_5(%arg0: i32) -> (i32, i32) {
    %c0_i32 = arith.constant 0 : i32
    %c0_i32_0 = arith.constant 0 : i32
    %c0_i32_1 = arith.constant 0 : i32
    return %c0_i32, %c0_i32_0 : i32, i32
  }
}

</mosaic_0001>

<llo_original>
// kernel: dice_loss_w_sigmoid.1
$region0: #{dice_loss_w_sigmoid.1}
  #allocation0 [shape = 'u32[]', space=smem, size = 0x4, offset = 0x4, fixed_abs, tag = 'smem constant byte address 0x4 - core index']
  #allocation1 [shape = 'u32[72,128]{1,0:T(1,128)}', space=vmem, size = 0x9000, scoped, tag = 'internal scratch']
  %s0 = inlined_call_operand.vmem [shape: f32[8,128], index: 0, kind: input, shape index: {}]
  %s1 = inlined_call_operand.vmem [shape: f32[8,128], index: 1, kind: input, shape index: {}]
  %s2 = inlined_call_operand.vmem [shape: f32[8,128], index: 2, kind: output, shape index: {0}]
  %s3 = inlined_call_operand.vmem [shape: f32[8,128], index: 3, kind: output, shape index: {1}]
  %s4 = inlined_call_operand.vmem [shape: f32[8,128], index: 4, kind: output, shape index: {2}]
  %s5 = inlined_call_operand.vmem [shape: f32[8,128], index: 5, kind: output, shape index: {3}]
  %6 = xla_tuple %s2, %s3, %s4, %s5
  %s7 = sld [smem:[#allocation0]]
  $region46: #{dice_loss_w_sigmoid.1} parent=0
    _
  %s9 = ssub.s32 1, %s7
  %s10 = scalar_select 0, %s9, %s7
  // Predicated region
  $region2: #{dice_loss_w_sigmoid.1} parent=0 // pred_check
    _
  $region3: #{dice_loss_w_sigmoid.1} parent=0 // pred_check_branch
    %12 = sbr.rel (0) target = $region5
  $region4: #{dice_loss_w_sigmoid.1} parent=0 // pred_region
    _
  $region5: #{dice_loss_w_sigmoid.1} parent=0 // pred_fallthru
    _
  // Predicated region
  $region6: #{dice_loss_w_sigmoid.1} parent=0 // pred_check
    _
  $region7: #{dice_loss_w_sigmoid.1} parent=0 // pred_check_branch
    %14 = sbr.rel (0) target = $region9
  $region8: #{dice_loss_w_sigmoid.1} parent=0 // pred_region
    _
  $region9: #{dice_loss_w_sigmoid.1} parent=0 // pred_fallthru
    _
  %p15 = scmp.eq.s32.totalorder 0, 0
  // Predicated region
  $region10: #{dice_loss_w_sigmoid.1} parent=0 // pred_check
    %p16 = pneg %p15
  $region11: #{dice_loss_w_sigmoid.1} parent=0 // pred_check_branch
    %18 = sbr.rel (%p16) target = $region13
  $region12: #{dice_loss_w_sigmoid.1} parent=0 // pred_region
    %19 = vst [vmem:[%s2] sm:$0xff] 0.0
    %20 = vst [vmem:[%s3] sm:$0xff] 0.0
    %21 = vst [vmem:[%s4] sm:$0xff] 0.0
    %22 = vst [vmem:[%s5] sm:$0xff] 0.0
  $region13: #{dice_loss_w_sigmoid.1} parent=0 // pred_fallthru
    _
  %v23 = vld [vmem:[%s0] sm:$0xff]
  %v24 = vld [vmem:[%s1] sm:$0xff]
  %vm25 = vcmp.gt.f32.partialorder %v23, 0.0
  %v26 = vmax.f32 %v23, 0.0
  %v27 = vmul.f32 %v23, %v24
  %v28 = vsub.f32 %v26, %v27
  %v29 = vand.u32 2147483647, %v23
  %v30 = vsub.f32 0.0, %v29
  %v31 = vmul.f32 %v30, 1.442695
  %v32 = vpow.pop %v31
  %v33 = vadd.f32 %v32, 1.0
  %v34 = vlog2.pop %v33
  %v35 = vmul.f32 %v34, 0.6931472
  %v36 = vmul.f32 -0.5, %v32
  %v37 = vadd.f32 %v36, 1.0
  %v38 = vmul.f32 %v37, %v32
  %v39 = vand.u32 2147483647, %v32
  %vm40 = vcmp.lt.f32.partialorder %v39, 0.0004427343
  %v41 = vsel %vm40, %v38, %v35
  %v42 = vadd.f32 %v28, %v41
  %v43 = vsel %vm25, %v24, 0.0
  %v44 = vsel %vm25, 1, 0
  %v45 = vcvt.s32.f32 %v44
  %v46 = vadd.f32 %v43, 0.0
  %v47 = vadd.f32 %v45, 0.0
  %v48 = vadd.f32 %v24, 0.0
  %v49 = vadd.f32 %v42, 0.0
  %v50 = vld [vmem:[%s2] sm:$0xff]
  %v51 = vadd.f32 %v50, %v46
  %52 = vst [vmem:[%s2] sm:$0xff] %v51
  %v53 = vld [vmem:[%s3] sm:$0xff]
  %v54 = vadd.f32 %v53, %v47
  %55 = vst [vmem:[%s3] sm:$0xff] %v54
  %v56 = vld [vmem:[%s4] sm:$0xff]
  %v57 = vadd.f32 %v56, %v48
  %58 = vst [vmem:[%s4] sm:$0xff] %v57
  %v59 = vld [vmem:[%s5] sm:$0xff]
  %v60 = vadd.f32 %v59, %v49
  %61 = vst [vmem:[%s5] sm:$0xff] %v60
  // Predicated region
  $region14: #{dice_loss_w_sigmoid.1} parent=0 // pred_check
    _
  $region15: #{dice_loss_w_sigmoid.1} parent=0 // pred_check_branch
    %63 = sbr.rel (0) target = $region17
  $region16: #{dice_loss_w_sigmoid.1} parent=0 // pred_region
    _
  $region17: #{dice_loss_w_sigmoid.1} parent=0 // pred_fallthru
    _
  // Predicated region
  $region18: #{dice_loss_w_sigmoid.1} parent=0 // pred_check
    _
  $region19: #{dice_loss_w_sigmoid.1} parent=0 // pred_check_branch
    %65 = sbr.rel (0) target = $region21
  $region20: #{dice_loss_w_sigmoid.1} parent=0 // pred_region
    _
  $region21: #{dice_loss_w_sigmoid.1} parent=0 // pred_fallthru
    _
  // Predicated region
  $region22: #{dice_loss_w_sigmoid.1} parent=0 // pred_check
    _
  $region23: #{dice_loss_w_sigmoid.1} parent=0 // pred_check_branch
    %67 = sbr.rel (0) target = $region25
  $region24: #{dice_loss_w_sigmoid.1} parent=0 // pred_region
    _
  $region25: #{dice_loss_w_sigmoid.1} parent=0 // pred_fallthru
    _
  // Predicated region
  $region26: #{dice_loss_w_sigmoid.1} parent=0 // pred_check
    _
  $region27: #{dice_loss_w_sigmoid.1} parent=0 // pred_check_branch
    %69 = sbr.rel (0) target = $region29
  $region28: #{dice_loss_w_sigmoid.1} parent=0 // pred_region
    _
  $region29: #{dice_loss_w_sigmoid.1} parent=0 // pred_fallthru
    _
  // Predicated region
  $region30: #{dice_loss_w_sigmoid.1} parent=0 // pred_check
    _
  $region31: #{dice_loss_w_sigmoid.1} parent=0 // pred_check_branch
    %71 = sbr.rel (0) target = $region33
  $region32: #{dice_loss_w_sigmoid.1} parent=0 // pred_region
    _
  $region33: #{dice_loss_w_sigmoid.1} parent=0 // pred_fallthru
    _
  // Predicated region
  $region34: #{dice_loss_w_sigmoid.1} parent=0 // pred_check
    _
  $region35: #{dice_loss_w_sigmoid.1} parent=0 // pred_check_branch
    %73 = sbr.rel (0) target = $region37
  $region36: #{dice_loss_w_sigmoid.1} parent=0 // pred_region
    _
  $region37: #{dice_loss_w_sigmoid.1} parent=0 // pred_fallthru
    _
  // Predicated region
  $region38: #{dice_loss_w_sigmoid.1} parent=0 // pred_check
    _
  $region39: #{dice_loss_w_sigmoid.1} parent=0 // pred_check_branch
    %75 = sbr.rel (0) target = $region41
  $region40: #{dice_loss_w_sigmoid.1} parent=0 // pred_region
    _
  $region41: #{dice_loss_w_sigmoid.1} parent=0 // pred_fallthru
    _
  // Predicated region
  $region42: #{dice_loss_w_sigmoid.1} parent=0 // pred_check
    _
  $region43: #{dice_loss_w_sigmoid.1} parent=0 // pred_check_branch
    %77 = sbr.rel (0) target = $region45
  $region44: #{dice_loss_w_sigmoid.1} parent=0 // pred_region
    _
  $region45: #{dice_loss_w_sigmoid.1} parent=0 // pred_fallthru
    _

</llo_original>
